<compile_context>
chip_gen: v5e
topology: v5e:2x2
jax: 0.10.0
libtpu: 0.0.40
codegen_flags: <defaults>
</compile_context>

<pallas_src>
import functools
import math

import jax
import jax.numpy as jnp
from jax.experimental import pallas as pl
from jax.experimental.pallas import tpu as pltpu


def make_positional_encoding_table(d_model, max_len=5000, dtype=jnp.float32):
    """Sin/cos table, identical values to the torch buffer; returned as (max_len, d_model)."""
    position = jnp.arange(max_len, dtype=jnp.float32)[:, None]            # (L, 1)
    div_term = jnp.exp(
        jnp.arange(0, d_model, 2, dtype=jnp.float32)
        * (-math.log(10000.0) / d_model))                                 # (D/2,)
    angles = position * div_term                                          # (L, D/2)
    pe = jnp.zeros((max_len, d_model), dtype=jnp.float32)
    pe = pe.at[:, 0::2].set(jnp.sin(angles))
    pe = pe.at[:, 1::2].set(jnp.cos(angles))
    return pe.astype(dtype)                                               # (L, D)


def _broadcast_pe(pe_blk, batch):
    # (bs, D) -> (bs, B*D): B lane-concatenated copies, matching the
    # (S, B*D) row layout [x[s,0,:], x[s,1,:], ..., x[s,B-1,:]].
    if batch == 1:
        return pe_blk
    return jnp.concatenate([pe_blk] * batch, axis=-1)


def _pe_add_kernel(x_ref, pe_ref, o_ref, *, batch):
    # Eval mode: dropout is identity -> just the broadcast add.
    y = x_ref[...] + _broadcast_pe(pe_ref[...], batch)
    o_ref[...] = y.astype(o_ref.dtype)


def _pe_add_dropout_kernel(x_ref, pe_ref, mask_ref, o_ref, *, batch, scale):
    # Training mode: inverted dropout; keep-mask (0/1, x dtype) streamed in.
    y = x_ref[...] + _broadcast_pe(pe_ref[...], batch)
    y = y * mask_ref[...] * scale
    o_ref[...] = y.astype(o_ref.dtype)


def _pick_block_s(seq_len, row_bytes, target_bytes=1 << 20):
    """Seq-rows per block: ~1 MiB x block, multiple of 8 rows (fits all chips'
    default scoped VMEM even when double-buffered with out + mask + pe)."""
    bs = max(8, (target_bytes // max(row_bytes, 1)) // 8 * 8)
    return seq_len if bs >= seq_len else int(bs)


def positional_encoding_forward(x, pe, *, p=0.1, training=False, seed=0,
                                block_s=None):
    """x: (S, B, D); pe: (max_len, D) or torch-style (max_len, 1, D).
    Returns dropout(x + pe[:S]) with the same semantics as the torch module."""
    S, B, D = x.shape
    if pe.ndim == 3:                       # accept the torch buffer layout
        pe = pe.reshape(pe.shape[0], pe.shape[-1])
    assert pe.shape[0] >= S and pe.shape[1] == D
    pe = pe.astype(x.dtype)                # halves pe DMA bytes for bf16 inputs

    x2 = x.reshape(S, B * D)               # lane-dense, contiguous view (free)
    row_bytes = B * D * x2.dtype.itemsize
    if block_s is None:
        block_s = _pick_block_s(S, row_bytes)
    grid = (pl.cdiv(S, block_s),)

    x_spec = pl.BlockSpec((block_s, B * D), lambda i: (i, 0))
    pe_spec = pl.BlockSpec((block_s, D), lambda i: (i, 0))
    mask_spec = pl.BlockSpec((block_s, B * D), lambda i: (i, 0))
    out_spec = pl.BlockSpec((block_s, B * D), lambda i: (i, 0))
    out_shape = jax.ShapeDtypeStruct((S, B * D), x.dtype)

    use_dropout = training and p > 0.0

    # Scoped-VMEM budget: double-buffered x-in + out (+ mask) + pe, 2x headroom,
    # clamped so it is valid on v5e/v6e (128 MiB) and v7x (64 MiB) alike.
    n_big = 3 if use_dropout else 2
    est = 2 * (n_big * block_s * row_bytes + block_s * D * pe.dtype.itemsize)
    compiler_params = pltpu.CompilerParams(
        dimension_semantics=("parallel",),
        vmem_limit_bytes=int(min(max(2 * est, 16 * 1024 * 1024),
                                 48 * 1024 * 1024)),
    )

    if not use_dropout:
        out2 = pl.pallas_call(
            functools.partial(_pe_add_kernel, batch=B),
            grid=grid,
            in_specs=[x_spec, pe_spec],
            out_specs=out_spec,
            out_shape=out_shape,
            compiler_params=compiler_params,
        )(x2, pe)
        return out2.reshape(S, B, D)

    if p >= 1.0:                            # degenerate torch case: drop everything
        return jnp.zeros_like(x)

    # TODO(synk): dropout mask comes from jax.random in the wrapper (streamed as
    # an input) instead of torch's RNG / in-kernel TPU PRNG; the Bernoulli
    # keep-prob + 1/(1-p) scaling semantics match, the bit stream does not.
    keep = jax.random.bernoulli(jax.random.PRNGKey(seed), 1.0 - p, (S, B * D))
    keep = keep.astype(x.dtype)
    scale = 1.0 / (1.0 - p)

    out2 = pl.pallas_call(
        functools.partial(_pe_add_dropout_kernel, batch=B, scale=scale),
        grid=grid,
        in_specs=[x_spec, pe_spec, mask_spec],
        out_specs=out_spec,
        out_shape=out_shape,
        compiler_params=compiler_params,
    )(x2, pe, keep)
    return out2.reshape(S, B, D)


if __name__ == "__main__":
    key = jax.random.PRNGKey(0)
    S, B, D = 8, 2, 32                      # seq=8, batch=2, d_model=32
    x = jax.random.normal(key, (S, B, D), dtype=jnp.float32)
    pe = make_positional_encoding_table(D, max_len=64)

    # --- eval-mode forward (dropout = identity), single-block grid ---
    y_eval = jax.block_until_ready(
        positional_encoding_forward(x, pe, training=False))
    ref = x + pe[:S][:, None, :]
    assert y_eval.shape == (S, B, D)
    assert jnp.allclose(y_eval, ref, atol=1e-6, rtol=1e-6), "eval mismatch"

    # --- eval-mode forward with a multi-step grid (exercises tiling/pipelining) ---
    S2 = 32
    x3 = jax.random.normal(jax.random.PRNGKey(1), (S2, B, D), dtype=jnp.float32)
    y_tiled = jax.block_until_ready(
        positional_encoding_forward(x3, pe, training=False, block_s=8))
    ref3 = x3 + pe[:S2][:, None, :]
    assert jnp.allclose(y_tiled, ref3, atol=1e-6, rtol=1e-6), "tiled mismatch"

    # --- training-mode forward (dropout active) ---
    p = 0.1
    y_train = jax.block_until_ready(
        positional_encoding_forward(x, pe, p=p, training=True, seed=0))
    assert y_train.shape == (S, B, D)
    expected_kept = ref / (1.0 - p)
    ok = (jnp.isclose(y_train, 0.0, atol=1e-6)
          | jnp.isclose(y_train, expected_kept, atol=1e-5, rtol=1e-5))
    assert bool(jnp.all(ok)), "dropout output not in {0, (x+pe)/(1-p)}"

    print("KERNEL_OK")
</pallas_src>

<mosaic_0001>
module attributes {stable_mosaic.version = 11 : i64} {
  func.func @_pe_add_kernel(%arg0: i32, %arg1: memref<8x64xf32, #tpu.memory_space<vmem>>, %arg2: memref<8x32xf32, #tpu.memory_space<vmem>>, %arg3: memref<8x64xf32, #tpu.memory_space<vmem>>) attributes {dimension_semantics = [#tpu.dimension_semantics<parallel>], iteration_bounds = array<i64: 1>, scalar_prefetch = 0 : i64, scratch_operands = 0 : i64, tpu.core_type = #tpu.core_type<tc>, window_params = [{transform_indices = @transform_0, window_bounds = array<i64: 8, 64>}, {transform_indices = @transform_1, window_bounds = array<i64: 8, 32>}, {transform_indices = @transform_2, window_bounds = array<i64: 8, 64>}]} {
    %c0 = arith.constant 0 : index
    %c0_0 = arith.constant 0 : index
    %0 = vector.load %arg1[%c0, %c0_0] : memref<8x64xf32, #tpu.memory_space<vmem>>, vector<8x64xf32>
    %c0_1 = arith.constant 0 : index
    %c0_2 = arith.constant 0 : index
    %1 = vector.load %arg2[%c0_1, %c0_2] : memref<8x32xf32, #tpu.memory_space<vmem>>, vector<8x32xf32>
    %2 = tpu.concatenate %1, %1 in 1 : vector<8x32xf32>, vector<8x32xf32> -> vector<8x64xf32>
    %3 = arith.addf %0, %2 : vector<8x64xf32>
    %c0_3 = arith.constant 0 : index
    %c0_4 = arith.constant 0 : index
    %4 = vector.load %arg3[%c0_3, %c0_4] : memref<8x64xf32, #tpu.memory_space<vmem>>, vector<8x64xf32>
    tpu.vector_store %arg3[%c0_3, %c0_4], %3 {strides = array<i32>} : memref<8x64xf32, #tpu.memory_space<vmem>>, vector<8x64xf32>,
    return
  }
  func.func @transform_0(%arg0: i32) -> (i32, i32) {
    %c0_i32 = arith.constant 0 : i32
    %c0_i32_0 = arith.constant 0 : i32
    return %arg0, %c0_i32 : i32, i32
  }
  func.func @transform_1(%arg0: i32) -> (i32, i32) {
    %c0_i32 = arith.constant 0 : i32
    %c0_i32_0 = arith.constant 0 : i32
    return %arg0, %c0_i32 : i32, i32
  }
  func.func @transform_2(%arg0: i32) -> (i32, i32) {
    %c0_i32 = arith.constant 0 : i32
    %c0_i32_0 = arith.constant 0 : i32
    return %arg0, %c0_i32 : i32, i32
  }
}

</mosaic_0001>

<llo_original>
// kernel: tpu_custom_call.1
$region0: #{tpu_custom_call.1}
  #allocation0 [shape = 'u32[]', space=smem, size = 0x4, offset = 0x4, fixed_abs, tag = 'smem constant byte address 0x4 - core index']
  #allocation1 [shape = 'u32[72,128]{1,0:T(1,128)}', space=vmem, size = 0x9000, scoped, tag = 'internal scratch']
  %s0 = inlined_call_operand.vmem [shape: f32[8,64], index: 0, kind: input, shape index: {}]
  %s1 = inlined_call_operand.vmem [shape: f32[64,32], index: 1, kind: input, shape index: {}]
  %s2 = inlined_call_operand.hbm [shape: f32[8,64], index: 2, kind: output, shape index: {}]
  %s3 = sld [smem:[#allocation0]]
  $region18: #{tpu_custom_call.1} parent=0
    _
  %s5 = ssub.s32 1, %s3
  %s6 = scalar_select 0, %s5, %s3
  $region1: #{tpu_custom_call.1} parent=0
    #allocation2 [shape = 'u8[4096]{0}', space=vmem, size = 0x1000, scoped, tag = 'output window, operand 0, single buffered']
    #allocation3 [shape = 's32[1]{0}', space=sflag, size = 0x4, scoped, tag = 'scoped memory for tpu_custom_call.1']
    %7 = vsyncpa [#allocation3], 0
    // Predicated region
    $region2: #{tpu_custom_call.1} parent=1 // pred_check
      _
    $region3: #{tpu_custom_call.1} parent=1 // pred_check_branch
      %9 = sbr.rel (0) target = $region5
    $region4: #{tpu_custom_call.1} parent=1 // pred_region
      _
    $region5: #{tpu_custom_call.1} parent=1 // pred_fallthru
      _
    // Predicated region
    $region6: #{tpu_custom_call.1} parent=1 // pred_check
      _
    $region7: #{tpu_custom_call.1} parent=1 // pred_check_branch
      %11 = sbr.rel (0) target = $region9
    $region8: #{tpu_custom_call.1} parent=1 // pred_region
      _
    $region9: #{tpu_custom_call.1} parent=1 // pred_fallthru
      _
    %v12 = vld [vmem:[%s0] sm:$0xff]
    %v13 = vld [vmem:[%s1] sm:$0xff]
    %15 = vrot.lane.b32.xlu0 %v13, 32
    %v16 = vpop.permute.xlu0 %15
    %vm18 = vcmask 261120
    %v19 = vsel %vm18, %v13, %v16
    %v20 = vadd.f32 %v12, %v19
    %vm21 = vcmask 523264
    %22 = vst.msk [vmem:[#allocation2] sm:$0xff] %vm21, %v20
    // Predicated region
    $region10: #{tpu_custom_call.1} parent=1 // pred_check
      _
    $region11: #{tpu_custom_call.1} parent=1 // pred_check_branch
      %24 = sbr.rel (0) target = $region13
    $region12: #{tpu_custom_call.1} parent=1 // pred_region
      %26 = vsyncadd [#allocation3], 0
      %s28 = sshll.u32 [#allocation2], 4
      %s29 = int_to_ptr.vmem [resolvable:$true] %s28
      %s30 = sshll.u32 %s2, 4
      %s31 = int_to_ptr.hbm [resolvable:$true] %s30
      %33 = dma.vmem_to_hbm [thread:$0]  %s29, 128, %s31, [#allocation3]
    $region13: #{tpu_custom_call.1} parent=1 // pred_fallthru
      _
    // Predicated region
    $region14: #{tpu_custom_call.1} parent=1 // pred_check
      _
    $region15: #{tpu_custom_call.1} parent=1 // pred_check_branch
      %35 = sbr.rel (0) target = $region17
    $region16: #{tpu_custom_call.1} parent=1 // pred_region
      %37 = dma.done [#allocation3], 128
    $region17: #{tpu_custom_call.1} parent=1 // pred_fallthru
      _
    %38 = vsyncpa [#allocation3], 1

</llo_original>
